<compile_context>
chip_gen: v5e
topology: v5e:2x2
jax: 0.10.0
libtpu: 0.0.40
codegen_flags: <defaults>
</compile_context>

<pallas_src>
import math

import jax
import jax.numpy as jnp
from jax.experimental import pallas as pl
from jax.experimental.pallas import tpu as pltpu


def make_positional_encoding(dmodel: int, max_seq_length: int,
                             dtype=jnp.float32) -> jnp.ndarray:
    """Builds the `pe` buffer exactly like the PyTorch __init__
    (sin on even dims, cos on odd dims).  Guards the odd-dmodel case."""
    position = jnp.arange(0, max_seq_length, dtype=jnp.float32)[:, None]       # (L, 1)
    div_term = jnp.exp(
        jnp.arange(0, dmodel, 2, dtype=jnp.float32) * -(math.log(10000.0) / dmodel)
    )                                                                           # (ceil(D/2),)
    angles = position * div_term                                                # (L, ceil(D/2))
    pe = jnp.zeros((max_seq_length, dmodel), dtype=jnp.float32)
    pe = pe.at[:, 0::2].set(jnp.sin(angles))
    pe = pe.at[:, 1::2].set(jnp.cos(angles[:, : dmodel // 2]))                  # odd-D safe
    return pe[None, :, :].astype(dtype)                                         # (1, L, D)


def _pos_enc_kernel(x_ref, pe_ref, o_ref):
    # x_ref: (TB, TS*D), pe_ref: (1, TS*D) — broadcasts over the batch rows.
    # Native dtype throughout (pe pre-cast in the wrapper): pure HBM-bound add.
    o_ref[...] = x_ref[...] + pe_ref[...]


def _device_params():
    """(block_budget_bytes, vmem_limit_bytes, is_v7x) keyed off the chip."""
    try:
        kind = jax.devices()[0].device_kind.lower()
    except Exception:  # pragma: no cover - defensive
        kind = ""
    if "v7" in kind:
        # 3.2 TB/s HBM makes the ~0.35 us per-step cost visible -> 8 MiB blocks;
        # only 64 MiB physical VMEM -> cap the scoped limit at 48 MiB.
        return 8 * 1024 * 1024, 48 * 1024 * 1024, True
    # v5e / v6e: 128 MiB physical VMEM; 4 MiB blocks already sit near the HBM
    # roofline, 64 MiB scoped limit gives comfortable double-buffer headroom.
    return 4 * 1024 * 1024, 64 * 1024 * 1024, False


def _choose_tiles(B, S, D, itemsize, block_budget):
    """Jointly pick (tb, ts) so the (tb, ts*D) block is as close to the byte
    budget as possible while staying lane/sublane-legal for the dtype."""
    sub = max(8, 32 // itemsize)   # sublane quantum: 8 f32 / 16 bf16 / 32 int8

    # Seq-tile candidates (descending): divisors of S whose flattened width is
    # lane-dense (multiple of 128) — or the full dim S itself.
    seq_cands = [c for c in range(S, 0, -1)
                 if S % c == 0 and ((c * D) % 128 == 0 or c == S)]

    # Batch-tile candidates (descending): full batch (always legal), otherwise
    # multiples of the sublane quantum.  tb does NOT have to divide B — the
    # grid uses cdiv and Pallas masks the partial last block.
    bat_cands = [B]
    t = (B // sub) * sub
    while t >= sub:
        if t <= B and t not in bat_cands:
            bat_cands.append(t)
        t = ((t // 2) // sub) * sub
    if sub <= B and sub not in bat_cands:
        bat_cands.append(sub)

    best = None       # largest block <= budget
    fallback = None   # smallest legal block (used only if nothing fits)
    for tb in bat_cands:
        for ts in seq_cands:
            blk = tb * ts * D * itemsize
            if fallback is None or blk < fallback[0]:
                fallback = (blk, tb, ts)
            if blk <= block_budget and (best is None or blk > best[0]):
                best = (blk, tb, ts)
    _, tb, ts = best if best is not None else fallback
    # TODO(synk): if a single (min-tb, min-ts) block still exceeds VMEM
    # (pathological S*D), the feature dim would also need tiling.
    return tb, ts, seq_cands, sub


def positional_encoding_forward(x: jnp.ndarray, pe: jnp.ndarray) -> jnp.ndarray:
    """x: (B, S, D); pe: (1, max_seq_length, D).  Returns x + pe[:, :S, :]."""
    B, S, D = x.shape
    L = pe.shape[1]
    assert L >= S and pe.shape[2] == D

    pe = pe.astype(x.dtype)                     # one-time cast: native-dtype add
    itemsize = jnp.dtype(x.dtype).itemsize
    block_budget, vmem_limit, is_v7 = _device_params()
    tb, ts, seq_cands, sub = _choose_tiles(B, S, D, itemsize, block_budget)

    # v7x has two TensorCores: make sure a non-trivial input produces >= 2
    # parallel grid steps so both cores get work.
    total_bytes = B * S * D * itemsize
    if is_v7 and total_bytes > 2 * 1024 * 1024 and (S // ts) * pl.cdiv(B, tb) == 1:
        smaller = [c for c in seq_cands if c < ts]
        if smaller:
            ts = smaller[0]
        elif B > sub:
            tb = max(sub, (((B + 1) // 2) // sub) * sub)

    # Degenerate case: only the full-S tile is lane-legal and S*D is not a
    # multiple of 128 -> shrink pe so its block equals its full dims (keeps the
    # BlockSpec legal).  Normal shapes never take this branch.
    if ts == S and (S * D) % 128 != 0 and S != L:
        pe = pe[:, :S, :]
        L = S

    # Lane-dense 2-D views (contiguous row-major reshapes, no data movement).
    x2 = x.reshape(B, S * D)
    pe2 = pe.reshape(1, L * D)

    width = ts * D
    n_s = S // ts
    n_b = pl.cdiv(B, tb)

    out2 = pl.pallas_call(
        _pos_enc_kernel,
        out_shape=jax.ShapeDtypeStruct((B, S * D), x.dtype),
        grid=(n_s, n_b),                                      # seq outer, batch inner
        in_specs=[
            pl.BlockSpec((tb, width), lambda s, b: (b, s)),   # x tile
            pl.BlockSpec((1, width), lambda s, b: (0, s)),    # pe tile (resident over b)
        ],
        out_specs=pl.BlockSpec((tb, width), lambda s, b: (b, s)),
        input_output_aliases={0: 0},                          # donate x2 -> out2
        compiler_params=pltpu.CompilerParams(
            dimension_semantics=("parallel", "parallel"),
            vmem_limit_bytes=vmem_limit,
        ),
    )(x2, pe2)

    return out2.reshape(B, S, D)


if __name__ == "__main__":
    # Small shapes consistent with the module: batch=2, seq=8, dmodel=32, max_seq_length=16.
    B, S, D, L = 2, 8, 32, 16

    key = jax.random.PRNGKey(0)
    x = jax.random.normal(key, (B, S, D), dtype=jnp.float32)
    pe = make_positional_encoding(dmodel=D, max_seq_length=L)

    # Reference (plain JAX, same math as the PyTorch forward), computed first
    # so the donated kernel input can never interfere with it.
    ref = x + pe[:, :S, :]

    out = positional_encoding_forward(x, pe)
    out = jax.block_until_ready(out)

    assert out.shape == (B, S, D)
    assert jnp.allclose(out, ref, atol=1e-6, rtol=1e-6)

    print("KERNEL_OK")
</pallas_src>

<mosaic_0001>
module attributes {stable_mosaic.version = 11 : i64} {
  func.func @_pos_enc_kernel(%arg0: i32, %arg1: i32, %arg2: memref<2x256xf32, #tpu.memory_space<vmem>>, %arg3: memref<1x256xf32, #tpu.memory_space<vmem>>, %arg4: memref<2x256xf32, #tpu.memory_space<vmem>>) attributes {dimension_semantics = [#tpu.dimension_semantics<parallel>, #tpu.dimension_semantics<parallel>], iteration_bounds = array<i64: 1, 1>, scalar_prefetch = 0 : i64, scratch_operands = 0 : i64, tpu.core_type = #tpu.core_type<tc>, window_params = [{transform_indices = @transform_0, window_bounds = array<i64: 2, 256>}, {transform_indices = @transform_1, window_bounds = array<i64: 1, 256>}, {transform_indices = @transform_2, window_bounds = array<i64: 2, 256>}]} {
    %c0 = arith.constant 0 : index
    %c0_0 = arith.constant 0 : index
    %0 = vector.load %arg2[%c0, %c0_0] : memref<2x256xf32, #tpu.memory_space<vmem>>, vector<2x256xf32>
    %c0_1 = arith.constant 0 : index
    %c0_2 = arith.constant 0 : index
    %1 = vector.load %arg3[%c0_1, %c0_2] : memref<1x256xf32, #tpu.memory_space<vmem>>, vector<1x256xf32>
    %2 = vector.broadcast %1 : vector<1x256xf32> to vector<2x256xf32>
    %3 = arith.addf %0, %2 : vector<2x256xf32>
    %c0_3 = arith.constant 0 : index
    %c0_4 = arith.constant 0 : index
    %4 = vector.load %arg4[%c0_3, %c0_4] : memref<2x256xf32, #tpu.memory_space<vmem>>, vector<2x256xf32>
    tpu.vector_store %arg4[%c0_3, %c0_4], %3 {strides = array<i32>} : memref<2x256xf32, #tpu.memory_space<vmem>>, vector<2x256xf32>,
    return
  }
  func.func @transform_0(%arg0: i32, %arg1: i32) -> (i32, i32) {
    %c0_i32 = arith.constant 0 : i32
    return %arg1, %arg0 : i32, i32
  }
  func.func @transform_1(%arg0: i32, %arg1: i32) -> (i32, i32) {
    %c0_i32 = arith.constant 0 : i32
    %c0_i32_0 = arith.constant 0 : i32
    return %c0_i32, %arg0 : i32, i32
  }
  func.func @transform_2(%arg0: i32, %arg1: i32) -> (i32, i32) {
    %c0_i32 = arith.constant 0 : i32
    return %arg1, %arg0 : i32, i32
  }
}

</mosaic_0001>

<llo_original>
// kernel: tpu_custom_call.1
$region0: #{tpu_custom_call.1}
  #allocation0 [shape = 'u32[]', space=smem, size = 0x4, offset = 0x4, fixed_abs, tag = 'smem constant byte address 0x4 - core index']
  #allocation1 [shape = 'u32[72,128]{1,0:T(1,128)}', space=vmem, size = 0x9000, scoped, tag = 'internal scratch']
  %s0 = inlined_call_operand.hbm [shape: f32[2,256], index: 0, kind: input, shape index: {}, may-alias: {0,2}]
  %s1 = inlined_call_operand.vmem [shape: f32[1,512], index: 1, kind: input, shape index: {}]
  %s2 = inlined_call_operand.hbm [shape: f32[2,256], index: 2, kind: output, shape index: {}, may-alias: {0,2}]
  %s3 = sld [smem:[#allocation0]]
  $region22: #{tpu_custom_call.1} parent=0
    _
  %s5 = ssub.s32 1, %s3
  %s6 = scalar_select 0, %s5, %s3
  $region1: #{tpu_custom_call.1} parent=0
    #allocation2 [shape = 'u8[2048]{0}', space=vmem, size = 0x800, scoped, tag = 'input window, operand 0, single buffered']
    #allocation3 [shape = 's32[1]{0}', space=sflag, size = 0x4, scoped, tag = 'scoped memory for tpu_custom_call.1']
    #allocation4 [shape = 's32[1]{0}', space=sflag, size = 0x4, scoped, tag = 'scoped memory for tpu_custom_call.1']
    #allocation5 [shape = 'u8[2048]{0}', space=vmem, size = 0x800, scoped, tag = 'output window, operand 0, single buffered']
    %7 = vsyncpa [#allocation3], 0
    %8 = vsyncpa [#allocation4], 0
    // Predicated region
    $region2: #{tpu_custom_call.1} parent=1 // pred_check
      _
    $region3: #{tpu_custom_call.1} parent=1 // pred_check_branch
      %10 = sbr.rel (0) target = $region5
    $region4: #{tpu_custom_call.1} parent=1 // pred_region
      %12 = vsyncadd [#allocation3], 0
      %s14 = sshll.u32 %s0, 4
      %s15 = int_to_ptr.hbm [resolvable:$true] %s14
      %s16 = sshll.u32 [#allocation2], 4
      %s17 = int_to_ptr.vmem [resolvable:$true] %s16
      %19 = dma.hbm_to_vmem [thread:$0]  %s15, 64, %s17, [#allocation3]
    $region5: #{tpu_custom_call.1} parent=1 // pred_fallthru
      _
    // Predicated region
    $region6: #{tpu_custom_call.1} parent=1 // pred_check
      _
    $region7: #{tpu_custom_call.1} parent=1 // pred_check_branch
      %21 = sbr.rel (0) target = $region9
    $region8: #{tpu_custom_call.1} parent=1 // pred_region
      _
    $region9: #{tpu_custom_call.1} parent=1 // pred_fallthru
      _
    // Predicated region
    $region10: #{tpu_custom_call.1} parent=1 // pred_check
      _
    $region11: #{tpu_custom_call.1} parent=1 // pred_check_branch
      %23 = sbr.rel (0) target = $region13
    $region12: #{tpu_custom_call.1} parent=1 // pred_region
      %25 = dma.done [#allocation3], 64
    $region13: #{tpu_custom_call.1} parent=1 // pred_fallthru
      _
    %v26 = vld [vmem:[#allocation2] sm:$0xf]
    %v27 = vld [vmem:[%s1] sm:$0x3]
    %v29 = vperm.slane %v27, 0
    %v30 = vperm.slane %v27, 1
    %v31 = vrot.slane %v30, 6
    %vm32 = vcmask 1041408
    %v33 = vsel %vm32, %v29, %v31
    %v35 = vadd.f32 %v26, %v33
    %36 = vst [vmem:[#allocation5] sm:$0xf] %v35
    // Predicated region
    $region14: #{tpu_custom_call.1} parent=1 // pred_check
      _
    $region15: #{tpu_custom_call.1} parent=1 // pred_check_branch
      %38 = sbr.rel (0) target = $region17
    $region16: #{tpu_custom_call.1} parent=1 // pred_region
      %40 = vsyncadd [#allocation4], 0
      %s42 = sshll.u32 [#allocation5], 4
      %s43 = int_to_ptr.vmem [resolvable:$true] %s42
      %s44 = sshll.u32 %s2, 4
      %s45 = int_to_ptr.hbm [resolvable:$true] %s44
      %47 = dma.vmem_to_hbm [thread:$0]  %s43, 64, %s45, [#allocation4]
    $region17: #{tpu_custom_call.1} parent=1 // pred_fallthru
      _
    // Predicated region
    $region18: #{tpu_custom_call.1} parent=1 // pred_check
      _
    $region19: #{tpu_custom_call.1} parent=1 // pred_check_branch
      %49 = sbr.rel (0) target = $region21
    $region20: #{tpu_custom_call.1} parent=1 // pred_region
      %51 = dma.done [#allocation4], 64
    $region21: #{tpu_custom_call.1} parent=1 // pred_fallthru
      _
    %52 = vsyncpa [#allocation3], 1
    %53 = vsyncpa [#allocation4], 1

</llo_original>
